<compile_context>
chip_gen: v5e
topology: v5e:2x2
jax: 0.10.0
libtpu: 0.0.40
codegen_flags: <defaults>
</compile_context>

<pallas_src>
import functools
import math

import jax
import jax.numpy as jnp
from jax import lax
from jax.experimental import pallas as pl
from jax.experimental.pallas import tpu as pltpu


def _round_up(x, m):
    return ((x + m - 1) // m) * m


def memory_unit_kernel(x_ref, w_ref, out_ref, att_ref, *, shrink_thres, mem_valid):
    """One row-tile of the MemAE memory addressing.

    x_ref:   (tm, fea_pad)      input rows (native dtype)
    w_ref:   (mem_pad, fea_pad) full (padded) memory bank, grid-invariant
    out_ref: (tm, fea_pad)
    att_ref: (tm, mem_pad)
    """
    x = x_ref[...]
    w = w_ref[...]
    mem_pad = w_ref.shape[0]

    # logits = x @ W.T without materializing a transpose of W: contract the
    # last (feature) dims of both operands, f32 accumulation on the MXU.
    logits = lax.dot_general(
        x, w,
        dimension_numbers=(((1,), (1,)), ((), ())),
        preferred_element_type=jnp.float32,
    )

    # Mask padded memory slots so they receive zero softmax weight.
    if mem_valid < mem_pad:
        col = lax.broadcasted_iota(jnp.int32, logits.shape, 1)
        logits = jnp.where(col < mem_valid, logits, -1e30)

    # Softmax over the memory dimension.  The per-row denominator is only
    # (tm, 1) values -> use an exact reciprocal so att tracks the reference
    # tightly around the hard-shrink threshold (approx recip here previously
    # caused threshold flips).
    m = jnp.max(logits, axis=-1, keepdims=True)
    e = jnp.exp(logits - m)
    denom = jnp.sum(e, axis=-1, keepdims=True)
    att = e * (1.0 / denom)

    if shrink_thres > 0:
        # hard_shrink_relu: relu(a - l) * a / (|a - l| + 1e-12).  This divide
        # spans the full (tm, mem_pad) tile -> approx reciprocal (EUP slot,
        # essentially free; does not affect the relu threshold decision).
        shifted = att - shrink_thres
        att = (jnp.maximum(shifted, 0.0) * att
               * pl.reciprocal(jnp.abs(shifted) + 1e-12, approx=True))
        # F.normalize(p=1, dim=1): att >= 0 here, so |att| == att.  Per-row
        # normalizer is (tm, 1) -> exact reciprocal.
        l1 = jnp.sum(att, axis=-1, keepdims=True)
        att = att * (1.0 / jnp.maximum(l1, 1e-12))

    # output = att @ W; cast att to the weight dtype so bf16 banks hit the
    # fast MXU path while accumulation stays f32 (no-op for f32 models).
    out = jnp.dot(att.astype(w_ref.dtype), w, preferred_element_type=jnp.float32)

    out_ref[...] = out.astype(out_ref.dtype)
    att_ref[...] = att.astype(att_ref.dtype)


def _vmem_params():
    """Returns (tile VMEM budget, vmem_limit_bytes, tm_max) for this TPU gen."""
    cap = 64 * 1024 * 1024
    try:
        info = pltpu.get_tpu_info()
        cap = int(getattr(info, "vmem_capacity_bytes", cap)) or cap
    except Exception:
        pass
    if cap >= 100 * 1024 * 1024:          # v5e / v6e: 128 MiB physical VMEM
        return 96 * 1024 * 1024, 100 * 1024 * 1024, 1024
    return 44 * 1024 * 1024, 48 * 1024 * 1024, 512   # v7x: 64 MiB physical


def _pick_row_tile(n_rows, fea_pad, mem_pad, itemsize, tm_max, vmem_budget):
    """Largest row tile (multiple of 8, <= tm_max) fitting the VMEM budget."""
    tm = min(tm_max, _round_up(n_rows, 8))
    while tm > 8:
        need = itemsize * mem_pad * fea_pad                        # W (1-buffered)
        need += 2 * itemsize * (2 * tm * fea_pad + tm * mem_pad)   # dbl-buf x/out/att
        need += 4 * 4 * tm * mem_pad                               # f32 elementwise temps
        if need <= vmem_budget:
            break
        tm = _round_up(tm // 2, 8)
    return max(tm, 8)


def _weight_block_spec(mem_pad, fea_pad):
    # The W block index never changes across the grid -> single-buffer it so
    # the second pipeline buffer's VMEM can go to a bigger row tile instead.
    try:
        return pl.BlockSpec((mem_pad, fea_pad), lambda i: (0, 0),
                            pipeline_mode=pl.Buffered(buffer_count=1))
    except Exception:   # jax version without pipeline_mode: default 2-buffer
        return pl.BlockSpec((mem_pad, fea_pad), lambda i: (0, 0))


def memory_unit_forward(x, weight, shrink_thres=0.0025):
    """x: (T, fea_dim), weight: (mem_dim, fea_dim) -> (output, att)."""
    T, fea_dim = x.shape
    mem_dim, fea_dim_w = weight.shape
    assert fea_dim == fea_dim_w

    fea_pad = _round_up(fea_dim, 128)
    mem_pad = _round_up(mem_dim, 128)

    vmem_budget, vmem_limit, tm_max = _vmem_params()
    # Ensure >= 2 grid steps when T allows so the "parallel" row axis can be
    # sharded across both TensorCores on v7x (harmless on single-TC chips).
    tm_max = min(tm_max, max(8, _round_up(-(-T // 2), 8)))
    tm = _pick_row_tile(T, fea_pad, mem_pad, x.dtype.itemsize, tm_max, vmem_budget)
    T_pad = _round_up(T, tm)

    x_p = x if (T_pad == T and fea_pad == fea_dim) else jnp.pad(
        x, ((0, T_pad - T), (0, fea_pad - fea_dim)))
    w_p = weight if (mem_pad == mem_dim and fea_pad == fea_dim) else jnp.pad(
        weight, ((0, mem_pad - mem_dim), (0, fea_pad - fea_dim)))

    kernel = functools.partial(
        memory_unit_kernel, shrink_thres=shrink_thres, mem_valid=mem_dim)

    out_p, att_p = pl.pallas_call(
        kernel,
        out_shape=(
            jax.ShapeDtypeStruct((T_pad, fea_pad), x.dtype),
            jax.ShapeDtypeStruct((T_pad, mem_pad), x.dtype),
        ),
        grid_spec=pltpu.PrefetchScalarGridSpec(
            num_scalar_prefetch=0,
            grid=(T_pad // tm,),
            in_specs=[
                pl.BlockSpec((tm, fea_pad), lambda i: (i, 0)),   # x row tile
                _weight_block_spec(mem_pad, fea_pad),            # full W bank
            ],
            out_specs=[
                pl.BlockSpec((tm, fea_pad), lambda i: (i, 0)),
                pl.BlockSpec((tm, mem_pad), lambda i: (i, 0)),
            ],
        ),
        compiler_params=pltpu.CompilerParams(
            dimension_semantics=("parallel",),
            vmem_limit_bytes=vmem_limit,
        ),
    )(x_p, w_p)

    return out_p[:T, :fea_dim], att_p[:T, :mem_dim]


def mem_module_forward(x, weight, shrink_thres=0.0025):
    """MemModule.forward: x is (N, C, *spatial) with C == fea_dim.

    The NCHW<->channels-last transposes are required by the module interface
    (layout plumbing in plain JAX, outside the kernel).
    """
    s = x.shape
    ndim = x.ndim
    assert ndim in (3, 4, 5), "expected 3-D / 4-D / 5-D feature map"
    C = s[1]
    mem_dim = weight.shape[0]
    perm = (0,) + tuple(range(2, ndim)) + (1,)
    x_flat = jnp.transpose(x, perm).reshape(-1, C)
    out_flat, att_flat = memory_unit_forward(x_flat, weight, shrink_thres)
    inv_perm = (0, ndim - 1) + tuple(range(1, ndim - 1))
    out = jnp.transpose(out_flat.reshape((s[0],) + s[2:] + (C,)), inv_perm)
    att = jnp.transpose(att_flat.reshape((s[0],) + s[2:] + (mem_dim,)), inv_perm)
    return {"output": out, "att": att}


# ----------------------------- pure-JAX reference -----------------------------

def _reference_memory_unit(x, weight, shrink_thres):
    att = jax.nn.softmax(x @ weight.T, axis=1)
    if shrink_thres > 0:
        shifted = att - shrink_thres
        att = jnp.maximum(shifted, 0.0) * att / (jnp.abs(shifted) + 1e-12)
        att = att / jnp.maximum(jnp.sum(jnp.abs(att), axis=1, keepdims=True), 1e-12)
    return att @ weight, att


def _reference_mem_module(x, weight, shrink_thres):
    s = x.shape
    ndim = x.ndim
    C = s[1]
    mem_dim = weight.shape[0]
    perm = (0,) + tuple(range(2, ndim)) + (1,)
    x_flat = jnp.transpose(x, perm).reshape(-1, C)
    out_flat, att_flat = _reference_memory_unit(x_flat, weight, shrink_thres)
    inv_perm = (0, ndim - 1) + tuple(range(1, ndim - 1))
    out = jnp.transpose(out_flat.reshape((s[0],) + s[2:] + (C,)), inv_perm)
    att = jnp.transpose(att_flat.reshape((s[0],) + s[2:] + (mem_dim,)), inv_perm)
    return {"output": out, "att": att}


if __name__ == "__main__":
    # Small shapes consistent with MemModule on a 4-D (NCHW) feature map.
    N, C, H, W_sp = 2, 32, 8, 8       # C == fea_dim
    mem_dim = 100
    shrink_thres = 0.0025

    key = jax.random.PRNGKey(0)
    k_x, k_w = jax.random.split(key)

    # Parameter init matching reset_parameters(): uniform(-stdv, stdv),
    # stdv = 1 / sqrt(fea_dim).
    stdv = 1.0 / math.sqrt(C)
    weight = jax.random.uniform(
        k_w, (mem_dim, C), dtype=jnp.float32, minval=-stdv, maxval=stdv)
    x = jax.random.normal(k_x, (N, C, H, W_sp), dtype=jnp.float32)

    result = mem_module_forward(x, weight, shrink_thres)
    jax.block_until_ready(result)

    ref = _reference_mem_module(x, weight, shrink_thres)
    assert result["output"].shape == (N, C, H, W_sp)
    assert result["att"].shape == (N, mem_dim, H, W_sp)

    # hard_shrink_relu is discontinuous at the threshold: rows whose reference
    # softmax has an entry within 1e-4 of shrink_thres can legitimately "flip"
    # under f32 matmul reassociation / precision differences, so those rows
    # are excluded from the strict elementwise comparison.
    x_flat = jnp.transpose(x, (0, 2, 3, 1)).reshape(-1, C)
    att_soft = jax.nn.softmax(x_flat @ weight.T, axis=1)
    row_strict = jnp.all(jnp.abs(att_soft - shrink_thres) > 1e-4, axis=1)
    strict_rows = row_strict.reshape(N, H, W_sp)[:, None, :, :]   # (N,1,H,W)

    ok_out = jnp.isclose(result["output"], ref["output"], atol=2e-3, rtol=2e-3)
    ok_att = jnp.isclose(result["att"], ref["att"], atol=3e-3, rtol=3e-3)
    assert bool(jnp.all(ok_out | ~strict_rows))
    assert bool(jnp.all(ok_att | ~strict_rows))
    # The strict check must still cover a meaningful number of rows.
    assert int(jnp.sum(row_strict)) >= 8

    print("KERNEL_OK")
</pallas_src>

<mosaic_0001>
module attributes {stable_mosaic.version = 11 : i64} {
  func.func @memory_unit_kernel(%arg0: i32, %arg1: memref<64x128xf32, #tpu.memory_space<vmem>>, %arg2: memref<128x128xf32, #tpu.memory_space<vmem>>, %arg3: memref<64x128xf32, #tpu.memory_space<vmem>>, %arg4: memref<64x128xf32, #tpu.memory_space<vmem>>) attributes {dimension_semantics = [#tpu.dimension_semantics<parallel>], iteration_bounds = array<i64: 2>, scalar_prefetch = 0 : i64, scratch_operands = 0 : i64, tpu.core_type = #tpu.core_type<tc>, window_params = [{transform_indices = @transform_0, window_bounds = array<i64: 64, 128>}, {pipeline_mode = #tpu.pipeline_mode<synchronous>, transform_indices = @transform_1, window_bounds = array<i64: 128, 128>}, {transform_indices = @transform_2, window_bounds = array<i64: 64, 128>}, {transform_indices = @transform_3, window_bounds = array<i64: 64, 128>}]} {
    %c0 = arith.constant 0 : index
    %c0_0 = arith.constant 0 : index
    %0 = vector.load %arg1[%c0, %c0_0] : memref<64x128xf32, #tpu.memory_space<vmem>>, vector<64x128xf32>
    %c0_1 = arith.constant 0 : index
    %c0_2 = arith.constant 0 : index
    %1 = vector.load %arg2[%c0_1, %c0_2] : memref<128x128xf32, #tpu.memory_space<vmem>>, vector<128x128xf32>
    %cst = arith.constant dense<0.000000e+00> : vector<64x128xf32>
    %2 = tpu.matmul %0, %1, %cst {dimension_numbers = #tpu.dot_dimension_numbers<[1], [1], [0], [0], [0, 0, 1, 0], [], []>} : vector<64x128xf32>, vector<128x128xf32>, vector<64x128xf32> -> vector<64x128xf32>
    %3 = tpu.iota {dimensions = array<i32: 1>} : vector<64x128xi32>
    %c100_i32 = arith.constant 100 : i32
    %4 = vector.broadcast %c100_i32 : i32 to vector<64x128xi32>
    %5 = arith.cmpi slt, %3, %4 : vector<64x128xi32>
    %cst_3 = arith.constant -1.000000e+30 : f32
    %6 = vector.broadcast %cst_3 : f32 to vector<64x128xf32>
    %7 = arith.select %5, %2, %6 : vector<64x128xi1>, vector<64x128xf32>
    %cst_4 = arith.constant dense<0xFF800000> : vector<64xf32>
    %8 = vector.multi_reduction <maximumf>, %7, %cst_4 [1] : vector<64x128xf32> to vector<64xf32>
    %9 = vector.shape_cast %8 : vector<64xf32> to vector<64x1xf32>
    %10 = vector.broadcast %9 : vector<64x1xf32> to vector<64x128xf32>
    %11 = arith.subf %7, %10 : vector<64x128xf32>
    %12 = math.exp %11 : vector<64x128xf32>
    %cst_5 = arith.constant dense<0.000000e+00> : vector<64xf32>
    %13 = vector.multi_reduction <add>, %12, %cst_5 [1] : vector<64x128xf32> to vector<64xf32>
    %14 = vector.shape_cast %13 : vector<64xf32> to vector<64x1xf32>
    %cst_6 = arith.constant 1.000000e+00 : f32
    %15 = vector.broadcast %cst_6 : f32 to vector<64x1xf32>
    %16 = arith.divf %15, %14 : vector<64x1xf32>
    %17 = vector.broadcast %16 : vector<64x1xf32> to vector<64x128xf32>
    %18 = arith.mulf %12, %17 : vector<64x128xf32>
    %cst_7 = arith.constant 2.500000e-03 : f32
    %19 = vector.broadcast %cst_7 : f32 to vector<64x128xf32>
    %20 = arith.subf %18, %19 : vector<64x128xf32>
    %cst_8 = arith.constant 0.000000e+00 : f32
    %21 = vector.broadcast %cst_8 : f32 to vector<64x128xf32>
    %22 = arith.maximumf %20, %21 : vector<64x128xf32>
    %23 = arith.mulf %22, %18 : vector<64x128xf32>
    %24 = math.absf %20 : vector<64x128xf32>
    %cst_9 = arith.constant 9.99999996E-13 : f32
    %25 = vector.broadcast %cst_9 : f32 to vector<64x128xf32>
    %26 = arith.addf %24, %25 : vector<64x128xf32>
    %27 = tpu.reciprocal %26 {approx = true} : vector<64x128xf32> -> vector<64x128xf32>
    %28 = arith.mulf %23, %27 : vector<64x128xf32>
    %cst_10 = arith.constant dense<0.000000e+00> : vector<64xf32>
    %29 = vector.multi_reduction <add>, %28, %cst_10 [1] : vector<64x128xf32> to vector<64xf32>
    %30 = vector.shape_cast %29 : vector<64xf32> to vector<64x1xf32>
    %cst_11 = arith.constant 9.99999996E-13 : f32
    %31 = vector.broadcast %cst_11 : f32 to vector<64x1xf32>
    %32 = arith.maximumf %30, %31 : vector<64x1xf32>
    %cst_12 = arith.constant 1.000000e+00 : f32
    %33 = vector.broadcast %cst_12 : f32 to vector<64x1xf32>
    %34 = arith.divf %33, %32 : vector<64x1xf32>
    %35 = vector.broadcast %34 : vector<64x1xf32> to vector<64x128xf32>
    %36 = arith.mulf %28, %35 : vector<64x128xf32>
    %cst_13 = arith.constant dense<0.000000e+00> : vector<64x128xf32>
    %37 = tpu.matmul %36, %1, %cst_13 {dimension_numbers = #tpu.dot_dimension_numbers<[1], [0], [0], [1], [0, 0, 1, 1], [], []>} : vector<64x128xf32>, vector<128x128xf32>, vector<64x128xf32> -> vector<64x128xf32>
    %c0_14 = arith.constant 0 : index
    %c0_15 = arith.constant 0 : index
    %38 = vector.load %arg3[%c0_14, %c0_15] : memref<64x128xf32, #tpu.memory_space<vmem>>, vector<64x128xf32>
    tpu.vector_store %arg3[%c0_14, %c0_15], %37 {strides = array<i32>} : memref<64x128xf32, #tpu.memory_space<vmem>>, vector<64x128xf32>,
    %c0_16 = arith.constant 0 : index
    %c0_17 = arith.constant 0 : index
    %39 = vector.load %arg4[%c0_16, %c0_17] : memref<64x128xf32, #tpu.memory_space<vmem>>, vector<64x128xf32>
    tpu.vector_store %arg4[%c0_16, %c0_17], %36 {strides = array<i32>} : memref<64x128xf32, #tpu.memory_space<vmem>>, vector<64x128xf32>,
    return
  }
  func.func @transform_0(%arg0: i32) -> (i32, i32) {
    %c0_i32 = arith.constant 0 : i32
    %c0_i32_0 = arith.constant 0 : i32
    return %arg0, %c0_i32 : i32, i32
  }
  func.func @transform_1(%arg0: i32) -> (i32, i32) {
    %c0_i32 = arith.constant 0 : i32
    %c0_i32_0 = arith.constant 0 : i32
    %c0_i32_1 = arith.constant 0 : i32
    return %c0_i32, %c0_i32_0 : i32, i32
  }
  func.func @transform_2(%arg0: i32) -> (i32, i32) {
    %c0_i32 = arith.constant 0 : i32
    %c0_i32_0 = arith.constant 0 : i32
    return %arg0, %c0_i32 : i32, i32
  }
  func.func @transform_3(%arg0: i32) -> (i32, i32) {
    %c0_i32 = arith.constant 0 : i32
    %c0_i32_0 = arith.constant 0 : i32
    return %arg0, %c0_i32 : i32, i32
  }
}

</mosaic_0001>

<llo_original>
// kernel: tpu_custom_call.1
$region0: #{tpu_custom_call.1}
  #allocation0 [shape = 'u32[]', space=smem, size = 0x4, offset = 0x4, fixed_abs, tag = 'smem constant byte address 0x4 - core index']
  #allocation1 [shape = 'u32[72,128]{1,0:T(1,128)}', space=vmem, size = 0x9000, scoped, tag = 'internal scratch']
  %s0 = inlined_call_operand.hbm [shape: f32[128,128], index: 0, kind: input, shape index: {}]
  %s1 = inlined_call_operand.hbm [shape: f32[128,128], index: 1, kind: input, shape index: {}]
  %s2 = inlined_call_operand.hbm [shape: f32[128,128], index: 2, kind: output, shape index: {0}]
  %s3 = inlined_call_operand.hbm [shape: f32[128,128], index: 3, kind: output, shape index: {1}]
  %4 = xla_tuple %s2, %s3
  %s5 = sld [smem:[#allocation0]]
  $region57: #{tpu_custom_call.1} parent=0
    _
  %s7 = ssub.s32 1, %s5
  %s8 = scalar_select 0, %s7, %s5
  $region1: #{tpu_custom_call.1} parent=0
    #allocation2 [shape = 'u8[65536]{0}', space=vmem, size = 0x10000, scoped, tag = 'input window, operand 0']
    #allocation3 [shape = 's32[2]{0}', space=sflag, size = 0x8, scoped, tag = 'scoped memory for tpu_custom_call.1']
    #allocation4 [shape = 's32[2]{0}', space=sflag, size = 0x8, scoped, tag = 'scoped memory for tpu_custom_call.1']
    #allocation5 [shape = 'u8[65536]{0}', space=vmem, size = 0x10000, scoped, tag = 'input window, operand 1, single buffered']
    #allocation6 [shape = 's32[1]{0}', space=sflag, size = 0x4, scoped, tag = 'scoped memory for tpu_custom_call.1']
    #allocation7 [shape = 'u8[65536]{0}', space=vmem, size = 0x10000, scoped, tag = 'output window, operand 0']
    #allocation8 [shape = 'u8[65536]{0}', space=vmem, size = 0x10000, scoped, tag = 'output window, operand 1']
    #allocation9 [shape = 's32[2]{0}', space=sflag, size = 0x8, scoped, tag = 'scoped memory for tpu_custom_call.1']
    %9 = vsyncpa [#allocation3], 0
    %s10 = scalar_lea.sflag [#allocation3], 1
    %11 = vsyncpa %s10, 0
    %12 = vsyncpa [#allocation6], 0
    %13 = vsyncpa [#allocation4], 0
    %s14 = scalar_lea.sflag [#allocation4], 1
    %15 = vsyncpa %s14, 0
    %16 = vsyncpa [#allocation9], 0
    %s17 = scalar_lea.sflag [#allocation9], 1
    %18 = vsyncpa %s17, 0
    loop: start=0, step=1, limit=4
    $region2: #{tpu_custom_call.1} parent=1 // loop_pre_header
      _
    $region3: #{tpu_custom_call.1} parent=1 // loop_header
      %s20 = sphi 0, %s24
      %p21 = scmp.ge.s32.totalorder %s20, 4
      %s30 = sphi 0, %s32
      %s33 = sphi 0, %s30
      %s34 = sphi 0, %s33
      %s50 = sphi 0, %s34
      %s54 = sphi 0, %s54
      %s56 = sphi 0, %s54
      %s57 = sphi 0, %s56
      %s71 = sphi 0, %s57
      %s77 = sphi 0, %s79
      %s80 = sphi 0, %s77
      %s81 = sphi 0, %s80
      %s97 = sphi 0, %s81
      %s103 = sphi 0, %s105
      %s106 = sphi 0, %s103
      %s107 = sphi 0, %s106
      %s123 = sphi 0, %s107
    $region4: #{tpu_custom_call.1} parent=1 // loop_header_branch
      %23 = sbr.rel (%p21) target = $region8
    $region5: #{tpu_custom_call.1} parent=1 // loop_body
      %s25 = ssub.s32 %s20, 1
      %s26 = ssub.s32 %s20, 2
      %s27 = sadd.s32 %s20, 1
      %s28 = ssub.s32 %s20, %s27
      %p29 = scmp.eq.s32.totalorder %s28, 0
      %s31 = sadd.s32 %s30, 1
      %s32 = scalar_select %p29, %s30, %s31
      %p35 = pneg %p29
      %p36 = scmp.eq.s32.totalorder %s20, 1
      %p37 = por %p35, %p36
      %p38 = scmp.ne.s32.totalorder %s30, %s33
      %p39 = scmp.eq.s32.totalorder %s20, 0
      %p40 = por %p38, %p39
      %p41 = scmp.ne.s32.totalorder %s30, %s33
      %p42 = scmp.eq.s32.totalorder %s25, 1
      %p43 = por %p41, %p42
      %p44 = scmp.ne.s32.totalorder %s33, %s34
      %p45 = scmp.eq.s32.totalorder %s25, 0
      %p46 = por %p44, %p45
      %p47 = scmp.ne.s32.totalorder %s33, %s34
      %p48 = scmp.eq.s32.totalorder %s26, 1
      %p49 = por %p47, %p48
      %p51 = scmp.ne.s32.totalorder %s34, %s50
      %p52 = scmp.eq.s32.totalorder %s26, 0
      %p53 = por %p51, %p52
      %s55 = sadd.s32 %s54, 1
      %p58 = scmp.eq.s32.totalorder %s20, 1
      %p59 = scmp.ne.s32.totalorder %s54, %s56
      %p60 = scmp.eq.s32.totalorder %s20, 0
      %p61 = por %p59, %p60
      %p62 = scmp.ne.s32.totalorder %s54, %s56
      %p63 = scmp.eq.s32.totalorder %s25, 1
      %p64 = por %p62, %p63
      %p65 = scmp.ne.s32.totalorder %s56, %s57
      %p66 = scmp.eq.s32.totalorder %s25, 0
      %p67 = por %p65, %p66
      %p68 = scmp.ne.s32.totalorder %s56, %s57
      %p69 = scmp.eq.s32.totalorder %s26, 1
      %p70 = por %p68, %p69
      %p72 = scmp.ne.s32.totalorder %s57, %s71
      %p73 = scmp.eq.s32.totalorder %s26, 0
      %p74 = por %p72, %p73
      %s75 = ssub.s32 %s20, %s27
      %p76 = scmp.eq.s32.totalorder %s75, 0
      %s78 = sadd.s32 %s77, 1
      %s79 = scalar_select %p76, %s77, %s78
      %p82 = pneg %p76
      %p83 = scmp.eq.s32.totalorder %s20, 1
      %p84 = por %p82, %p83
      %p85 = scmp.ne.s32.totalorder %s77, %s80
      %p86 = scmp.eq.s32.totalorder %s20, 0
      %p87 = por %p85, %p86
      %p88 = scmp.ne.s32.totalorder %s77, %s80
      %p89 = scmp.eq.s32.totalorder %s25, 1
      %p90 = por %p88, %p89
      %p91 = scmp.ne.s32.totalorder %s80, %s81
      %p92 = scmp.eq.s32.totalorder %s25, 0
      %p93 = por %p91, %p92
      %p94 = scmp.ne.s32.totalorder %s80, %s81
      %p95 = scmp.eq.s32.totalorder %s26, 1
      %p96 = por %p94, %p95
      %p98 = scmp.ne.s32.totalorder %s81, %s97
      %p99 = scmp.eq.s32.totalorder %s26, 0
      %p100 = por %p98, %p99
      %s101 = ssub.s32 %s20, %s27
      %p102 = scmp.eq.s32.totalorder %s101, 0
      %s104 = sadd.s32 %s103, 1
      %s105 = scalar_select %p102, %s103, %s104
      %p108 = pneg %p102
      %p109 = scmp.eq.s32.totalorder %s20, 1
      %p110 = por %p108, %p109
      %p111 = scmp.ne.s32.totalorder %s103, %s106
      %p112 = scmp.eq.s32.totalorder %s20, 0
      %p113 = por %p111, %p112
      %p114 = scmp.ne.s32.totalorder %s103, %s106
      %p115 = scmp.eq.s32.totalorder %s25, 1
      %p116 = por %p114, %p115
      %p117 = scmp.ne.s32.totalorder %s106, %s107
      %p118 = scmp.eq.s32.totalorder %s25, 0
      %p119 = por %p117, %p118
      %p120 = scmp.ne.s32.totalorder %s106, %s107
      %p121 = scmp.eq.s32.totalorder %s26, 1
      %p122 = por %p120, %p121
      %p124 = scmp.ne.s32.totalorder %s107, %s123
      %p125 = scmp.eq.s32.totalorder %s26, 0
      %p126 = por %p124, %p125
      %p127 = scmp.le.s32.totalorder 1, %s20
      %p128 = scmp.lt.s32.totalorder %s20, 3
      %p129 = pnand %p127, %p128
      %p130 = pneg %p129
      // Predicated region
      $region9: #{tpu_custom_call.1} parent=5 // pred_check
        _
      $region10: #{tpu_custom_call.1} parent=5 // pred_check_branch
        %132 = sbr.rel (%p129) target = $region12
      $region11: #{tpu_custom_call.1} parent=5 // pred_region
        %s133 = ssub.s32 %s20, 1
        // Predicated region
        $region13: #{tpu_custom_call.1} parent=11 // pred_check
          %p134 = pneg %p67
        $region14: #{tpu_custom_call.1} parent=11 // pred_check_branch
          %136 = sbr.rel (%p134) target = $region16
        $region15: #{tpu_custom_call.1} parent=11 // pred_region
          %138 = vsyncadd [#allocation6], 0
          %s139 = sshll.u32 %s1, 4
          %s140 = int_to_ptr.hbm [resolvable:$true] %s139
          %s141 = sshll.u32 [#allocation5], 4
          %s142 = int_to_ptr.vmem [resolvable:$true] %s141
          %147 = dma.hbm_to_vmem [thread:$0]  %s140, 2048, %s142, [#allocation6], 128, 128, 8
        $region16: #{tpu_custom_call.1} parent=11 // pred_fallthru
          _
      $region12: #{tpu_custom_call.1} parent=5 // pred_fallthru
        _
      %p148 = scmp.lt.s32.totalorder %s20, 2
      // Predicated region
      $region17: #{tpu_custom_call.1} parent=5 // pred_check
        %p149 = pneg %p148
      $region18: #{tpu_custom_call.1} parent=5 // pred_check_branch
        %151 = sbr.rel (%p149) target = $region20
      $region19: #{tpu_custom_call.1} parent=5 // pred_region
        // Predicated region
        $region21: #{tpu_custom_call.1} parent=19 // pred_check
          %p152 = pneg %p40
        $region22: #{tpu_custom_call.1} parent=19 // pred_check_branch
          %154 = sbr.rel (%p152) target = $region24
        $region23: #{tpu_custom_call.1} parent=19 // pred_region
          %s155 = sand.u32 %s30, 1
          %s156 = scalar_lea.sflag [#allocation3], %s155
          %s157 = sand.u32 %s30, 1
          %s158 = smul.addr %s157, 64
          %s159 = scalar_lea.vmem [#allocation2], %s158
          %s160 = smul.u32 8, %s20
          %162 = vsyncadd %s156, 0
          %s163 = smul.addr %s160, 8
          %s164 = scalar_lea.hbm %s0, %s163
          %s165 = sshll.u32 %s164, 4
          %s166 = int_to_ptr.hbm [resolvable:$true] %s165
          %s167 = sshll.u32 %s159, 4
          %s168 = int_to_ptr.vmem [resolvable:$true] %s167
          %173 = dma.hbm_to_vmem [thread:$0]  %s166, 1024, %s168, %s156, 128, 128, 8
        $region24: #{tpu_custom_call.1} parent=19 // pred_fallthru
          _
      $region20: #{tpu_custom_call.1} parent=5 // pred_fallthru
        _
      %p174 = scmp.le.s32.totalorder 1, %s20
      %p175 = scmp.lt.s32.totalorder %s20, 3
      %p176 = pnand %p174, %p175
      %p177 = pneg %p176
      // Predicated region
      $region25: #{tpu_custom_call.1} parent=5 // pred_check
        _
      $region26: #{tpu_custom_call.1} parent=5 // pred_check_branch
        %179 = sbr.rel (%p176) target = $region28
      $region27: #{tpu_custom_call.1} parent=5 // pred_region
        %s180 = ssub.s32 %s20, 1
        %s181 = sand.u32 %s33, 1
        %s182 = scalar_lea.sflag [#allocation3], %s181
        %s183 = sand.u32 %s33, 1
        %s184 = smul.addr %s183, 64
        %s185 = scalar_lea.vmem [#allocation2], %s184
        // Predicated region
        $region29: #{tpu_custom_call.1} parent=27 // pred_check
          %p186 = pneg %p46
        $region30: #{tpu_custom_call.1} parent=27 // pred_check_branch
          %188 = sbr.rel (%p186) target = $region32
        $region31: #{tpu_custom_call.1} parent=27 // pred_region
          %190 = dma.done %s182, 1024
        $region32: #{tpu_custom_call.1} parent=27 // pred_fallthru
          _
        // Predicated region
        $region33: #{tpu_custom_call.1} parent=27 // pred_check
          %p191 = pneg %p67
        $region34: #{tpu_custom_call.1} parent=27 // pred_check_branch
          %193 = sbr.rel (%p191) target = $region36
        $region35: #{tpu_custom_call.1} parent=27 // pred_region
          %195 = dma.done [#allocation6], 2048
        $region36: #{tpu_custom_call.1} parent=27 // pred_fallthru
          _
        %s196 = sand.u32 %s33, 1
        %s197 = scalar_lea.sflag [#allocation3], %s196
        %s198 = sand.u32 %s33, 1
        %s199 = smul.addr %s198, 64
        %s200 = scalar_lea.vmem [#allocation2], %s199
        %p201 = pneg %p46
        %p202 = pneg %p43
        %p203 = pneg %p67
        %p204 = pneg %p64
        %p205 = pneg %p93
        %p206 = pneg %p90
        %s207 = sand.u32 %s80, 1
        %s208 = scalar_lea.sflag [#allocation4], %s207
        %s209 = sand.u32 %s80, 1
        %s210 = smul.addr %s209, 64
        %s211 = scalar_lea.vmem [#allocation7], %s210
        %p212 = pneg %p119
        %p213 = pneg %p116
        %s214 = sand.u32 %s106, 1
        %s215 = scalar_lea.sflag [#allocation9], %s214
        %s216 = sand.u32 %s106, 1
        %s217 = smul.addr %s216, 64
        %s218 = scalar_lea.vmem [#allocation8], %s217
        %s219 = smul.u32 8, %s25
        %s220 = smul.u32 8, %s25
        %s221 = smul.u32 8, %s25
        %v222 = vld [vmem:[%s185] sm:$0xff]
        %v223 = vld [vmem:[%s185 + $0x8] sm:$0xff]
        %v224 = vld [vmem:[%s185 + $0x10] sm:$0xff]
        %v225 = vld [vmem:[%s185 + $0x18] sm:$0xff]
        %v226 = vld [vmem:[%s185 + $0x20] sm:$0xff]
        %v227 = vld [vmem:[%s185 + $0x28] sm:$0xff]
        %v228 = vld [vmem:[%s185 + $0x30] sm:$0xff]
        %v229 = vld [vmem:[%s185 + $0x38] sm:$0xff]
        %v230 = vld [vmem:[#allocation5] sm:$0xff]
        %v231 = vld [vmem:[#allocation5 + $0x8] sm:$0xff]
        %v232 = vld [vmem:[#allocation5 + $0x10] sm:$0xff]
        %v233 = vld [vmem:[#allocation5 + $0x18] sm:$0xff]
        %v234 = vld [vmem:[#allocation5 + $0x20] sm:$0xff]
        %v235 = vld [vmem:[#allocation5 + $0x28] sm:$0xff]
        %v236 = vld [vmem:[#allocation5 + $0x30] sm:$0xff]
        %v237 = vld [vmem:[#allocation5 + $0x38] sm:$0xff]
        %v238 = vld [vmem:[#allocation5 + $0x40] sm:$0xff]
        %v239 = vld [vmem:[#allocation5 + $0x48] sm:$0xff]
        %v240 = vld [vmem:[#allocation5 + $0x50] sm:$0xff]
        %v241 = vld [vmem:[#allocation5 + $0x58] sm:$0xff]
        %v242 = vld [vmem:[#allocation5 + $0x60] sm:$0xff]
        %v243 = vld [vmem:[#allocation5 + $0x68] sm:$0xff]
        %v244 = vld [vmem:[#allocation5 + $0x70] sm:$0xff]
        %v245 = vld [vmem:[#allocation5 + $0x78] sm:$0xff]
        %246 = vmatpush.xpose.msra.mxu0 %v245
        %247 = vmatpush.xpose.msra.mxu0 %v244
        %248 = vmatpush.xpose.msra.mxu0 %v243
        %249 = vmatpush.xpose.msra.mxu0 %v242
        %250 = vmatpush.xpose.msra.mxu0 %v241
        %251 = vmatpush.xpose.msra.mxu0 %v240
        %252 = vmatpush.xpose.msra.mxu0 %v239
        %253 = vmatpush.xpose.msra.mxu0 %v238
        %254 = vmatpush.xpose.msra.mxu0 %v237
        %255 = vmatpush.xpose.msra.mxu0 %v236
        %256 = vmatpush.xpose.msra.mxu0 %v235
        %257 = vmatpush.xpose.msra.mxu0 %v234
        %258 = vmatpush.xpose.msra.mxu0 %v233
        %259 = vmatpush.xpose.msra.mxu0 %v232
        %260 = vmatpush.xpose.msra.mxu0 %v231
        %261 = vmatpush.xpose.msra.mxu0 %v230
        %262 = vmatmul.f32.gmra.mxu0 %v222
        %v263 = vpop.f32.mrf.mxu0
        %v264 = vadd.f32 0.0, %v263
        %265 = vmatmul.f32.gmra.mxu0 %v223
        %v266 = vpop.f32.mrf.mxu0
        %v267 = vadd.f32 0.0, %v266
        %268 = vmatmul.f32.gmra.mxu0 %v224
        %v269 = vpop.f32.mrf.mxu0
        %v270 = vadd.f32 0.0, %v269
        %271 = vmatmul.f32.gmra.mxu0 %v225
        %v272 = vpop.f32.mrf.mxu0
        %v273 = vadd.f32 0.0, %v272
        %274 = vmatmul.f32.gmra.mxu0 %v226
        %v275 = vpop.f32.mrf.mxu0
        %v276 = vadd.f32 0.0, %v275
        %277 = vmatmul.f32.gmra.mxu0 %v227
        %v278 = vpop.f32.mrf.mxu0
        %v279 = vadd.f32 0.0, %v278
        %280 = vmatmul.f32.gmra.mxu0 %v228
        %v281 = vpop.f32.mrf.mxu0
        %v282 = vadd.f32 0.0, %v281
        %283 = vmatmul.f32.gmra.mxu0 %v229
        %v284 = vpop.f32.mrf.mxu0
        %v285 = vadd.f32 0.0, %v284
        %286 = vdwg.mxu0
        %v287 = vlaneseq
        %v288 = vand.u32 %v287, 127
        %vm289 = vcmp.lt.s32.totalorder %v288, 100
        %v290 = vsel %vm289, %v264, -1e+30
        %v291 = vsel %vm289, %v267, -1e+30
        %v292 = vsel %vm289, %v270, -1e+30
        %v293 = vsel %vm289, %v273, -1e+30
        %v294 = vsel %vm289, %v276, -1e+30
        %v295 = vsel %vm289, %v279, -1e+30
        %v296 = vsel %vm289, %v282, -1e+30
        %v297 = vsel %vm289, %v285, -1e+30
        %298 = vmax.xlane.f32.xlu0 %v290
        %v299 = vpop.xlane.xlu0 %298
        %300 = vmax.xlane.f32.xlu0 %v291
        %v301 = vpop.xlane.xlu0 %300
        %302 = vmax.xlane.f32.xlu0 %v292
        %v303 = vpop.xlane.xlu0 %302
        %304 = vmax.xlane.f32.xlu0 %v293
        %v305 = vpop.xlane.xlu0 %304
        %306 = vmax.xlane.f32.xlu0 %v294
        %v307 = vpop.xlane.xlu0 %306
        %308 = vmax.xlane.f32.xlu0 %v295
        %v309 = vpop.xlane.xlu0 %308
        %310 = vmax.xlane.f32.xlu0 %v296
        %v311 = vpop.xlane.xlu0 %310
        %312 = vmax.xlane.f32.xlu0 %v297
        %v313 = vpop.xlane.xlu0 %312
        %v314 = vsub.f32 %v290, %v299
        %v315 = vsub.f32 %v291, %v301
        %v316 = vsub.f32 %v292, %v303
        %v317 = vsub.f32 %v293, %v305
        %v318 = vsub.f32 %v294, %v307
        %v319 = vsub.f32 %v295, %v309
        %v320 = vsub.f32 %v296, %v311
        %v321 = vsub.f32 %v297, %v313
        %v322 = vmul.f32 %v314, 1.442695
        %v323 = vpow.pop %v322
        %v324 = vmul.f32 %v315, 1.442695
        %v325 = vpow.pop %v324
        %v326 = vmul.f32 %v316, 1.442695
        %v327 = vpow.pop %v326
        %v328 = vmul.f32 %v317, 1.442695
        %v329 = vpow.pop %v328
        %v330 = vmul.f32 %v318, 1.442695
        %v331 = vpow.pop %v330
        %v332 = vmul.f32 %v319, 1.442695
        %v333 = vpow.pop %v332
        %v334 = vmul.f32 %v320, 1.442695
        %v335 = vpow.pop %v334
        %v336 = vmul.f32 %v321, 1.442695
        %v337 = vpow.pop %v336
        %338 = vadd.xlane.f32.xlu0 %v323
        %v339 = vpop.xlane.xlu0 %338
        %340 = vadd.xlane.f32.xlu0 %v325
        %v341 = vpop.xlane.xlu0 %340
        %342 = vadd.xlane.f32.xlu0 %v327
        %v343 = vpop.xlane.xlu0 %342
        %344 = vadd.xlane.f32.xlu0 %v329
        %v345 = vpop.xlane.xlu0 %344
        %346 = vadd.xlane.f32.xlu0 %v331
        %v347 = vpop.xlane.xlu0 %346
        %348 = vadd.xlane.f32.xlu0 %v333
        %v349 = vpop.xlane.xlu0 %348
        %350 = vadd.xlane.f32.xlu0 %v335
        %v351 = vpop.xlane.xlu0 %350
        %352 = vadd.xlane.f32.xlu0 %v337
        %v353 = vpop.xlane.xlu0 %352
        %v354 = vrcp.pop %v339
        %v355 = vmul.f32 %v339, %v354
        %v356 = vsub.f32 1.0, %v355
        %v357 = vmul.f32 %v354, %v356
        %v358 = vadd.f32 %v354, %v357
        %vm359 = vweird.f32 %v339
        %vm360 = vweird.f32 %v354
        %vm361 = vmor %vm359, %vm360
        %v362 = vsel %vm361, %v354, %v358
        %v363 = vand.u32 2147483647, %v339
        %vm364 = vcmp.eq.f32.partialorder %v363, 8.507059e+37
        %v365 = vand.u32 %v339, 2147483648
        %v366 = vor.u32 1.1754944e-38, %v365
        %v367 = vsel %vm364, %v366, %v362
        %v368 = vmul.f32 1.0, %v367
        %v369 = vrcp.pop %v341
        %v370 = vmul.f32 %v341, %v369
        %v371 = vsub.f32 1.0, %v370
        %v372 = vmul.f32 %v369, %v371
        %v373 = vadd.f32 %v369, %v372
        %vm374 = vweird.f32 %v341
        %vm375 = vweird.f32 %v369
        %vm376 = vmor %vm374, %vm375
        %v377 = vsel %vm376, %v369, %v373
        %v378 = vand.u32 2147483647, %v341
        %vm379 = vcmp.eq.f32.partialorder %v378, 8.507059e+37
        %v380 = vand.u32 %v341, 2147483648
        %v381 = vor.u32 1.1754944e-38, %v380
        %v382 = vsel %vm379, %v381, %v377
        %v383 = vmul.f32 1.0, %v382
        %v384 = vrcp.pop %v343
        %v385 = vmul.f32 %v343, %v384
        %v386 = vsub.f32 1.0, %v385
        %v387 = vmul.f32 %v384, %v386
        %v388 = vadd.f32 %v384, %v387
        %vm389 = vweird.f32 %v343
        %vm390 = vweird.f32 %v384
        %vm391 = vmor %vm389, %vm390
        %v392 = vsel %vm391, %v384, %v388
        %v393 = vand.u32 2147483647, %v343
        %vm394 = vcmp.eq.f32.partialorder %v393, 8.507059e+37
        %v395 = vand.u32 %v343, 2147483648
        %v396 = vor.u32 1.1754944e-38, %v395
        %v397 = vsel %vm394, %v396, %v392
        %v398 = vmul.f32 1.0, %v397
        %v399 = vrcp.pop %v345
        %v400 = vmul.f32 %v345, %v399
        %v401 = vsub.f32 1.0, %v400
        %v402 = vmul.f32 %v399, %v401
        %v403 = vadd.f32 %v399, %v402
        %vm404 = vweird.f32 %v345
        %vm405 = vweird.f32 %v399
        %vm406 = vmor %vm404, %vm405
        %v407 = vsel %vm406, %v399, %v403
        %v408 = vand.u32 2147483647, %v345
        %vm409 = vcmp.eq.f32.partialorder %v408, 8.507059e+37
        %v410 = vand.u32 %v345, 2147483648
        %v411 = vor.u32 1.1754944e-38, %v410
        %v412 = vsel %vm409, %v411, %v407
        %v413 = vmul.f32 1.0, %v412
        %v414 = vrcp.pop %v347
        %v415 = vmul.f32 %v347, %v414
        %v416 = vsub.f32 1.0, %v415
        %v417 = vmul.f32 %v414, %v416
        %v418 = vadd.f32 %v414, %v417
        %vm419 = vweird.f32 %v347
        %vm420 = vweird.f32 %v414
        %vm421 = vmor %vm419, %vm420
        %v422 = vsel %vm421, %v414, %v418
        %v423 = vand.u32 2147483647, %v347
        %vm424 = vcmp.eq.f32.partialorder %v423, 8.507059e+37
        %v425 = vand.u32 %v347, 2147483648
        %v426 = vor.u32 1.1754944e-38, %v425
        %v427 = vsel %vm424, %v426, %v422
        %v428 = vmul.f32 1.0, %v427
        %v429 = vrcp.pop %v349
        %v430 = vmul.f32 %v349, %v429
        %v431 = vsub.f32 1.0, %v430
        %v432 = vmul.f32 %v429, %v431
        %v433 = vadd.f32 %v429, %v432
        %vm434 = vweird.f32 %v349
        %vm435 = vweird.f32 %v429
        %vm436 = vmor %vm434, %vm435
        %v437 = vsel %vm436, %v429, %v433
        %v438 = vand.u32 2147483647, %v349
        %vm439 = vcmp.eq.f32.partialorder %v438, 8.507059e+37
        %v440 = vand.u32 %v349, 2147483648
        %v441 = vor.u32 1.1754944e-38, %v440
        %v442 = vsel %vm439, %v441, %v437
        %v443 = vmul.f32 1.0, %v442
        %v444 = vrcp.pop %v351
        %v445 = vmul.f32 %v351, %v444
        %v446 = vsub.f32 1.0, %v445
        %v447 = vmul.f32 %v444, %v446
        %v448 = vadd.f32 %v444, %v447
        %vm449 = vweird.f32 %v351
        %vm450 = vweird.f32 %v444
        %vm451 = vmor %vm449, %vm450
        %v452 = vsel %vm451, %v444, %v448
        %v453 = vand.u32 2147483647, %v351
        %vm454 = vcmp.eq.f32.partialorder %v453, 8.507059e+37
        %v455 = vand.u32 %v351, 2147483648
        %v456 = vor.u32 1.1754944e-38, %v455
        %v457 = vsel %vm454, %v456, %v452
        %v458 = vmul.f32 1.0, %v457
        %v459 = vrcp.pop %v353
        %v460 = vmul.f32 %v353, %v459
        %v461 = vsub.f32 1.0, %v460
        %v462 = vmul.f32 %v459, %v461
        %v463 = vadd.f32 %v459, %v462
        %vm464 = vweird.f32 %v353
        %vm465 = vweird.f32 %v459
        %vm466 = vmor %vm464, %vm465
        %v467 = vsel %vm466, %v459, %v463
        %v468 = vand.u32 2147483647, %v353
        %vm469 = vcmp.eq.f32.partialorder %v468, 8.507059e+37
        %v470 = vand.u32 %v353, 2147483648
        %v471 = vor.u32 1.1754944e-38, %v470
        %v472 = vsel %vm469, %v471, %v467
        %v473 = vmul.f32 1.0, %v472
        %v474 = vmul.f32 %v323, %v368
        %v475 = vmul.f32 %v325, %v383
        %v476 = vmul.f32 %v327, %v398
        %v477 = vmul.f32 %v329, %v413
        %v478 = vmul.f32 %v331, %v428
        %v479 = vmul.f32 %v333, %v443
        %v480 = vmul.f32 %v335, %v458
        %v481 = vmul.f32 %v337, %v473
        %v482 = vsub.f32 %v474, 0.0025
        %v483 = vsub.f32 %v475, 0.0025
        %v484 = vsub.f32 %v476, 0.0025
        %v485 = vsub.f32 %v477, 0.0025
        %v486 = vsub.f32 %v478, 0.0025
        %v487 = vsub.f32 %v479, 0.0025
        %v488 = vsub.f32 %v480, 0.0025
        %v489 = vsub.f32 %v481, 0.0025
        %v490 = vmax.f32 %v482, 0.0
        %v491 = vmax.f32 %v483, 0.0
        %v492 = vmax.f32 %v484, 0.0
        %v493 = vmax.f32 %v485, 0.0
        %v494 = vmax.f32 %v486, 0.0
        %v495 = vmax.f32 %v487, 0.0
        %v496 = vmax.f32 %v488, 0.0
        %v497 = vmax.f32 %v489, 0.0
        %v498 = vmul.f32 %v490, %v474
        %v499 = vmul.f32 %v491, %v475
        %v500 = vmul.f32 %v492, %v476
        %v501 = vmul.f32 %v493, %v477
        %v502 = vmul.f32 %v494, %v478
        %v503 = vmul.f32 %v495, %v479
        %v504 = vmul.f32 %v496, %v480
        %v505 = vmul.f32 %v497, %v481
        %v506 = vand.u32 2147483647, %v482
        %v507 = vand.u32 2147483647, %v483
        %v508 = vand.u32 2147483647, %v484
        %v509 = vand.u32 2147483647, %v485
        %v510 = vand.u32 2147483647, %v486
        %v511 = vand.u32 2147483647, %v487
        %v512 = vand.u32 2147483647, %v488
        %v513 = vand.u32 2147483647, %v489
        %v514 = vadd.f32 %v506, 1e-12
        %v515 = vadd.f32 %v507, 1e-12
        %v516 = vadd.f32 %v508, 1e-12
        %v517 = vadd.f32 %v509, 1e-12
        %v518 = vadd.f32 %v510, 1e-12
        %v519 = vadd.f32 %v511, 1e-12
        %v520 = vadd.f32 %v512, 1e-12
        %v521 = vadd.f32 %v513, 1e-12
        %v522 = vrcp.pop %v514
        %v523 = vrcp.pop %v515
        %v524 = vrcp.pop %v516
        %v525 = vrcp.pop %v517
        %v526 = vrcp.pop %v518
        %v527 = vrcp.pop %v519
        %v528 = vrcp.pop %v520
        %v529 = vrcp.pop %v521
        %v530 = vmul.f32 %v498, %v522
        %v531 = vmul.f32 %v499, %v523
        %v532 = vmul.f32 %v500, %v524
        %v533 = vmul.f32 %v501, %v525
        %v534 = vmul.f32 %v502, %v526
        %v535 = vmul.f32 %v503, %v527
        %v536 = vmul.f32 %v504, %v528
        %v537 = vmul.f32 %v505, %v529
        %538 = vadd.xlane.f32.xlu0 %v530
        %v539 = vpop.xlane.xlu0 %538
        %540 = vadd.xlane.f32.xlu0 %v531
        %v541 = vpop.xlane.xlu0 %540
        %542 = vadd.xlane.f32.xlu0 %v532
        %v543 = vpop.xlane.xlu0 %542
        %544 = vadd.xlane.f32.xlu0 %v533
        %v545 = vpop.xlane.xlu0 %544
        %546 = vadd.xlane.f32.xlu0 %v534
        %v547 = vpop.xlane.xlu0 %546
        %548 = vadd.xlane.f32.xlu0 %v535
        %v549 = vpop.xlane.xlu0 %548
        %550 = vadd.xlane.f32.xlu0 %v536
        %v551 = vpop.xlane.xlu0 %550
        %552 = vadd.xlane.f32.xlu0 %v537
        %v553 = vpop.xlane.xlu0 %552
        %v554 = vmax.f32 %v539, 1e-12
        %v555 = vmax.f32 %v541, 1e-12
        %v556 = vmax.f32 %v543, 1e-12
        %v557 = vmax.f32 %v545, 1e-12
        %v558 = vmax.f32 %v547, 1e-12
        %v559 = vmax.f32 %v549, 1e-12
        %v560 = vmax.f32 %v551, 1e-12
        %v561 = vmax.f32 %v553, 1e-12
        %v562 = vrcp.pop %v554
        %v563 = vmul.f32 %v554, %v562
        %v564 = vsub.f32 1.0, %v563
        %v565 = vmul.f32 %v562, %v564
        %v566 = vadd.f32 %v562, %v565
        %vm567 = vweird.f32 %v554
        %vm568 = vweird.f32 %v562
        %vm569 = vmor %vm567, %vm568
        %v570 = vsel %vm569, %v562, %v566
        %v571 = vand.u32 2147483647, %v554
        %vm572 = vcmp.eq.f32.partialorder %v571, 8.507059e+37
        %v573 = vand.u32 %v554, 2147483648
        %v574 = vor.u32 1.1754944e-38, %v573
        %v575 = vsel %vm572, %v574, %v570
        %v576 = vmul.f32 1.0, %v575
        %v577 = vrcp.pop %v555
        %v578 = vmul.f32 %v555, %v577
        %v579 = vsub.f32 1.0, %v578
        %v580 = vmul.f32 %v577, %v579
        %v581 = vadd.f32 %v577, %v580
        %vm582 = vweird.f32 %v555
        %vm583 = vweird.f32 %v577
        %vm584 = vmor %vm582, %vm583
        %v585 = vsel %vm584, %v577, %v581
        %v586 = vand.u32 2147483647, %v555
        %vm587 = vcmp.eq.f32.partialorder %v586, 8.507059e+37
        %v588 = vand.u32 %v555, 2147483648
        %v589 = vor.u32 1.1754944e-38, %v588
        %v590 = vsel %vm587, %v589, %v585
        %v591 = vmul.f32 1.0, %v590
        %v592 = vrcp.pop %v556
        %v593 = vmul.f32 %v556, %v592
        %v594 = vsub.f32 1.0, %v593
        %v595 = vmul.f32 %v592, %v594
        %v596 = vadd.f32 %v592, %v595
        %vm597 = vweird.f32 %v556
        %vm598 = vweird.f32 %v592
        %vm599 = vmor %vm597, %vm598
        %v600 = vsel %vm599, %v592, %v596
        %v601 = vand.u32 2147483647, %v556
        %vm602 = vcmp.eq.f32.partialorder %v601, 8.507059e+37
        %v603 = vand.u32 %v556, 2147483648
        %v604 = vor.u32 1.1754944e-38, %v603
        %v605 = vsel %vm602, %v604, %v600
        %v606 = vmul.f32 1.0, %v605
        %v607 = vrcp.pop %v557
        %v608 = vmul.f32 %v557, %v607
        %v609 = vsub.f32 1.0, %v608
        %v610 = vmul.f32 %v607, %v609
        %v611 = vadd.f32 %v607, %v610
        %vm612 = vweird.f32 %v557
        %vm613 = vweird.f32 %v607
        %vm614 = vmor %vm612, %vm613
        %v615 = vsel %vm614, %v607, %v611
        %v616 = vand.u32 2147483647, %v557
        %vm617 = vcmp.eq.f32.partialorder %v616, 8.507059e+37
        %v618 = vand.u32 %v557, 2147483648
        %v619 = vor.u32 1.1754944e-38, %v618
        %v620 = vsel %vm617, %v619, %v615
        %v621 = vmul.f32 1.0, %v620
        %v622 = vrcp.pop %v558
        %v623 = vmul.f32 %v558, %v622
        %v624 = vsub.f32 1.0, %v623
        %v625 = vmul.f32 %v622, %v624
        %v626 = vadd.f32 %v622, %v625
        %vm627 = vweird.f32 %v558
        %vm628 = vweird.f32 %v622
        %vm629 = vmor %vm627, %vm628
        %v630 = vsel %vm629, %v622, %v626
        %v631 = vand.u32 2147483647, %v558
        %vm632 = vcmp.eq.f32.partialorder %v631, 8.507059e+37
        %v633 = vand.u32 %v558, 2147483648
        %v634 = vor.u32 1.1754944e-38, %v633
        %v635 = vsel %vm632, %v634, %v630
        %v636 = vmul.f32 1.0, %v635
        %v637 = vrcp.pop %v559
        %v638 = vmul.f32 %v559, %v637
        %v639 = vsub.f32 1.0, %v638
        %v640 = vmul.f32 %v637, %v639
        %v641 = vadd.f32 %v637, %v640
        %vm642 = vweird.f32 %v559
        %vm643 = vweird.f32 %v637
        %vm644 = vmor %vm642, %vm643
        %v645 = vsel %vm644, %v637, %v641
        %v646 = vand.u32 2147483647, %v559
        %vm647 = vcmp.eq.f32.partialorder %v646, 8.507059e+37
        %v648 = vand.u32 %v559, 2147483648
        %v649 = vor.u32 1.1754944e-38, %v648
        %v650 = vsel %vm647, %v649, %v645
        %v651 = vmul.f32 1.0, %v650
        %v652 = vrcp.pop %v560
        %v653 = vmul.f32 %v560, %v652
        %v654 = vsub.f32 1.0, %v653
        %v655 = vmul.f32 %v652, %v654
        %v656 = vadd.f32 %v652, %v655
        %vm657 = vweird.f32 %v560
        %vm658 = vweird.f32 %v652
        %vm659 = vmor %vm657, %vm658
        %v660 = vsel %vm659, %v652, %v656
        %v661 = vand.u32 2147483647, %v560
        %vm662 = vcmp.eq.f32.partialorder %v661, 8.507059e+37
        %v663 = vand.u32 %v560, 2147483648
        %v664 = vor.u32 1.1754944e-38, %v663
        %v665 = vsel %vm662, %v664, %v660
        %v666 = vmul.f32 1.0, %v665
        %v667 = vrcp.pop %v561
        %v668 = vmul.f32 %v561, %v667
        %v669 = vsub.f32 1.0, %v668
        %v670 = vmul.f32 %v667, %v669
        %v671 = vadd.f32 %v667, %v670
        %vm672 = vweird.f32 %v561
        %vm673 = vweird.f32 %v667
        %vm674 = vmor %vm672, %vm673
        %v675 = vsel %vm674, %v667, %v671
        %v676 = vand.u32 2147483647, %v561
        %vm677 = vcmp.eq.f32.partialorder %v676, 8.507059e+37
        %v678 = vand.u32 %v561, 2147483648
        %v679 = vor.u32 1.1754944e-38, %v678
        %v680 = vsel %vm677, %v679, %v675
        %v681 = vmul.f32 1.0, %v680
        %v682 = vmul.f32 %v530, %v576
        %v683 = vmul.f32 %v531, %v591
        %v684 = vmul.f32 %v532, %v606
        %v685 = vmul.f32 %v533, %v621
        %v686 = vmul.f32 %v534, %v636
        %v687 = vmul.f32 %v535, %v651
        %v688 = vmul.f32 %v536, %v666
        %v689 = vmul.f32 %v537, %v681
        %690 = vmatpush.msra.mxu0 %v245
        %691 = vmatpush.msra.mxu0 %v244
        %692 = vmatpush.msra.mxu0 %v243
        %693 = vmatpush.msra.mxu0 %v242
        %694 = vmatpush.msra.mxu0 %v241
        %695 = vmatpush.msra.mxu0 %v240
        %696 = vmatpush.msra.mxu0 %v239
        %697 = vmatpush.msra.mxu0 %v238
        %698 = vmatpush.msra.mxu0 %v237
        %699 = vmatpush.msra.mxu0 %v236
        %700 = vmatpush.msra.mxu0 %v235
        %701 = vmatpush.msra.mxu0 %v234
        %702 = vmatpush.msra.mxu0 %v233
        %703 = vmatpush.msra.mxu0 %v232
        %704 = vmatpush.msra.mxu0 %v231
        %705 = vmatpush.msra.mxu0 %v230
        %706 = vmatmul.f32.gmra.mxu0 %v682
        %v707 = vpop.f32.mrf.mxu0
        %v708 = vadd.f32 0.0, %v707
        %709 = vmatmul.f32.gmra.mxu0 %v683
        %v710 = vpop.f32.mrf.mxu0
        %v711 = vadd.f32 0.0, %v710
        %712 = vmatmul.f32.gmra.mxu0 %v684
        %v713 = vpop.f32.mrf.mxu0
        %v714 = vadd.f32 0.0, %v713
        %715 = vmatmul.f32.gmra.mxu0 %v685
        %v716 = vpop.f32.mrf.mxu0
        %v717 = vadd.f32 0.0, %v716
        %718 = vmatmul.f32.gmra.mxu0 %v686
        %v719 = vpop.f32.mrf.mxu0
        %v720 = vadd.f32 0.0, %v719
        %721 = vmatmul.f32.gmra.mxu0 %v687
        %v722 = vpop.f32.mrf.mxu0
        %v723 = vadd.f32 0.0, %v722
        %724 = vmatmul.f32.gmra.mxu0 %v688
        %v725 = vpop.f32.mrf.mxu0
        %v726 = vadd.f32 0.0, %v725
        %727 = vmatmul.f32.gmra.mxu0 %v689
        %v728 = vpop.f32.mrf.mxu0
        %v729 = vadd.f32 0.0, %v728
        %730 = vdwg.mxu0
        %731 = vst [vmem:[%s211] sm:$0xff] %v708
        %732 = vst [vmem:[%s211 + $0x8] sm:$0xff] %v711
        %733 = vst [vmem:[%s211 + $0x10] sm:$0xff] %v714
        %734 = vst [vmem:[%s211 + $0x18] sm:$0xff] %v717
        %735 = vst [vmem:[%s211 + $0x20] sm:$0xff] %v720
        %736 = vst [vmem:[%s211 + $0x28] sm:$0xff] %v723
        %737 = vst [vmem:[%s211 + $0x30] sm:$0xff] %v726
        %738 = vst [vmem:[%s211 + $0x38] sm:$0xff] %v729
        %739 = vst [vmem:[%s218] sm:$0xff] %v682
        %740 = vst [vmem:[%s218 + $0x8] sm:$0xff] %v683
        %741 = vst [vmem:[%s218 + $0x10] sm:$0xff] %v684
        %742 = vst [vmem:[%s218 + $0x18] sm:$0xff] %v685
        %743 = vst [vmem:[%s218 + $0x20] sm:$0xff] %v686
        %744 = vst [vmem:[%s218 + $0x28] sm:$0xff] %v687
        %745 = vst [vmem:[%s218 + $0x30] sm:$0xff] %v688
        %746 = vst [vmem:[%s218 + $0x38] sm:$0xff] %v689
        %s747 = sand.u32 %s80, 1
        %s748 = scalar_lea.sflag [#allocation4], %s747
        %s749 = sand.u32 %s80, 1
        %s750 = smul.addr %s749, 64
        %s751 = scalar_lea.vmem [#allocation7], %s750
        %s752 = sand.u32 %s106, 1
        %s753 = scalar_lea.sflag [#allocation9], %s752
        %s754 = sand.u32 %s106, 1
        %s755 = smul.addr %s754, 64
        %s756 = scalar_lea.vmem [#allocation8], %s755
        // Predicated region
        $region37: #{tpu_custom_call.1} parent=27 // pred_check
          %p757 = pneg %p90
        $region38: #{tpu_custom_call.1} parent=27 // pred_check_branch
          %759 = sbr.rel (%p757) target = $region40
        $region39: #{tpu_custom_call.1} parent=27 // pred_region
          %s760 = smul.u32 8, %s25
          %762 = vsyncadd %s748, 0
          %s763 = smul.addr %s760, 8
          %s764 = scalar_lea.hbm %s2, %s763
          %s765 = sshll.u32 %s751, 4
          %s766 = int_to_ptr.vmem [resolvable:$true] %s765
          %s767 = sshll.u32 %s764, 4
          %s768 = int_to_ptr.hbm [resolvable:$true] %s767
          %773 = dma.vmem_to_hbm [thread:$0]  %s766, 1024, %s768, %s748, 128, 128, 8
        $region40: #{tpu_custom_call.1} parent=27 // pred_fallthru
          _
        // Predicated region
        $region41: #{tpu_custom_call.1} parent=27 // pred_check
          %p774 = pneg %p116
        $region42: #{tpu_custom_call.1} parent=27 // pred_check_branch
          %776 = sbr.rel (%p774) target = $region44
        $region43: #{tpu_custom_call.1} parent=27 // pred_region
          %s777 = smul.u32 8, %s25
          %779 = vsyncadd %s753, 0
          %s780 = smul.addr %s777, 8
          %s781 = scalar_lea.hbm %s3, %s780
          %s782 = sshll.u32 %s756, 4
          %s783 = int_to_ptr.vmem [resolvable:$true] %s782
          %s784 = sshll.u32 %s781, 4
          %s785 = int_to_ptr.hbm [resolvable:$true] %s784
          %790 = dma.vmem_to_hbm [thread:$0]  %s783, 1024, %s785, %s753, 128, 128, 8
        $region44: #{tpu_custom_call.1} parent=27 // pred_fallthru
          _
      $region28: #{tpu_custom_call.1} parent=5 // pred_fallthru
        _
      %p791 = scmp.le.s32.totalorder 2, %s20
      // Predicated region
      $region45: #{tpu_custom_call.1} parent=5 // pred_check
        %p792 = pneg %p791
      $region46: #{tpu_custom_call.1} parent=5 // pred_check_branch
        %794 = sbr.rel (%p792) target = $region48
      $region47: #{tpu_custom_call.1} parent=5 // pred_region
        %s795 = ssub.s32 %s20, 2
        // Predicated region
        $region49: #{tpu_custom_call.1} parent=47 // pred_check
          %p796 = pneg %p96
        $region50: #{tpu_custom_call.1} parent=47 // pred_check_branch
          %798 = sbr.rel (%p796) target = $region52
        $region51: #{tpu_custom_call.1} parent=47 // pred_region
          %s799 = sand.u32 %s81, 1
          %s800 = scalar_lea.sflag [#allocation4], %s799
          %s801 = sand.u32 %s81, 1
          %s802 = smul.addr %s801, 64
          %s803 = scalar_lea.vmem [#allocation7], %s802
          %805 = dma.done %s800, 1024
        $region52: #{tpu_custom_call.1} parent=47 // pred_fallthru
          _
        // Predicated region
        $region53: #{tpu_custom_call.1} parent=47 // pred_check
          %p806 = pneg %p122
        $region54: #{tpu_custom_call.1} parent=47 // pred_check_branch
          %808 = sbr.rel (%p806) target = $region56
        $region55: #{tpu_custom_call.1} parent=47 // pred_region
          %s809 = sand.u32 %s107, 1
          %s810 = scalar_lea.sflag [#allocation9], %s809
          %s811 = sand.u32 %s107, 1
          %s812 = smul.addr %s811, 64
          %s813 = scalar_lea.vmem [#allocation8], %s812
          %815 = dma.done %s810, 1024
        $region56: #{tpu_custom_call.1} parent=47 // pred_fallthru
          _
      $region48: #{tpu_custom_call.1} parent=5 // pred_fallthru
        _
    $region6: #{tpu_custom_call.1} parent=1 // loop_footer
      %s24 = sadd.s32 1, %s20
    $region7: #{tpu_custom_call.1} parent=1 // loop_footer_branch
      %19 = sbr.rel target = $region3
    $region8: #{tpu_custom_call.1} parent=1 // loop_exit
      _
    %816 = vsyncpa [#allocation3], 1
    %s817 = scalar_lea.sflag [#allocation3], 1
    %818 = vsyncpa %s817, 1
    %819 = vsyncpa [#allocation6], 1
    %820 = vsyncpa [#allocation4], 1
    %s821 = scalar_lea.sflag [#allocation4], 1
    %822 = vsyncpa %s821, 1
    %823 = vsyncpa [#allocation9], 1
    %s824 = scalar_lea.sflag [#allocation9], 1
    %825 = vsyncpa %s824, 1

</llo_original>
